<compile_context>
chip_gen: v7x
topology: tpu7x:2x2x1
jax: 0.10.0
libtpu: 0.0.40
codegen_flags: <defaults>
</compile_context>

<pallas_src>
import math

import jax
import jax.numpy as jnp
from jax.experimental import pallas as pl
from jax.experimental.pallas import tpu as pltpu


def _build_lstm_kernel(T, B, H):
    """Builds a kernel for a fixed (static) T, B, H.

    Kernel refs:
      x_ref     : (T*B, D)   all timestep inputs, row t*B + b = x[t, b]
      h0_ref    : (B, H)     initial hidden state
      c0_ref    : (B, H)     initial cell state
      wx_ref    : (D, 4H)    fused input->gate weights  [Wii^T Wif^T Wig^T Wio^T]
      wh_ref    : (H, 4H)    fused hidden->gate weights [Whi^T Whf^T Whg^T Who^T]
      b_ref     : (1, 4H)    fused bias
      hseq_ref  : (T*B, H)   per-step hidden states (row t*B + b)
      hlast_ref : (B, H)     final hidden state
      clast_ref : (B, H)     final cell state
    """

    def kernel(x_ref, h0_ref, c0_ref, wx_ref, wh_ref, b_ref,
               hseq_ref, hlast_ref, clast_ref):
        # One big MXU matmul for the x-dependent part of all gates, all steps.
        xg = jnp.dot(x_ref[...], wx_ref[...],
                     preferred_element_type=jnp.float32) + b_ref[...]   # (T*B, 4H)

        wh = wh_ref[...]            # (H, 4H), VMEM-resident, hoisted out of loop
        h = h0_ref[...]             # (B, H)  loop-carried in vregs
        c = c0_ref[...]             # (B, H)

        hs = []
        # Static T -> fully unrolled; LLO can overlap EUP sigmoid/tanh, MXU pops
        # and addressing across adjacent steps.
        for t in range(T):
            gates = xg[t * B:(t + 1) * B, :] + jnp.dot(
                h, wh, preferred_element_type=jnp.float32)              # (B, 4H)
            # Reference PyTorch code applies sigmoid to ALL four gates (incl. g_t).
            gates = jax.nn.sigmoid(gates)

            i_t = gates[:, 0 * H:1 * H]
            f_t = gates[:, 1 * H:2 * H]
            g_t = gates[:, 2 * H:3 * H]
            o_t = gates[:, 3 * H:4 * H]

            c = f_t * c + i_t * g_t
            h = o_t * jnp.tanh(c)
            hs.append(h)

        # Single store / single writeback DMA for the whole sequence of h's.
        hseq_ref[...] = jnp.concatenate(hs, axis=0)                     # (T*B, H)
        hlast_ref[...] = h
        clast_ref[...] = c

    return kernel


def _lstm_pallas(x2d, h0, c0, w_x, w_h, b):
    """x2d: (T*B, D); h0/c0: (B, H). Returns (h_seq (T*B,H), h_last (B,H), c_last (B,H))."""
    TB, D = x2d.shape
    B, H = h0.shape
    T = TB // B
    kernel = _build_lstm_kernel(T, B, H)
    vmem = pl.BlockSpec(memory_space=pltpu.MemorySpace.VMEM)
    return pl.pallas_call(
        kernel,
        out_shape=(jax.ShapeDtypeStruct((TB, H), jnp.float32),
                   jax.ShapeDtypeStruct((B, H), jnp.float32),
                   jax.ShapeDtypeStruct((B, H), jnp.float32)),
        in_specs=[vmem] * 6,           # everything resident in VMEM, no grid
        out_specs=(vmem, vmem, vmem),
    )(x2d, h0, c0, w_x, w_h, b)


lstm_pallas = jax.jit(_lstm_pallas)


class LSTMPallas:
    """Mirrors the PyTorch LSTM module's forward semantics."""

    def __init__(self, input_size, hidden_size, key):
        self.input_size = input_size
        self.hidden_size = hidden_size
        stdv = 1.0 / math.sqrt(hidden_size)
        keys = jax.random.split(key, 12)

        def u(k, shape):
            return jax.random.uniform(k, shape, jnp.float32, -stdv, stdv)

        # Same parameter shapes as the PyTorch module.
        self.w_ii = u(keys[0], (hidden_size, input_size))
        self.w_if = u(keys[1], (hidden_size, input_size))
        self.w_ig = u(keys[2], (hidden_size, input_size))
        self.w_io = u(keys[3], (hidden_size, input_size))
        self.w_hi = u(keys[4], (hidden_size, hidden_size))
        self.w_hf = u(keys[5], (hidden_size, hidden_size))
        self.w_hg = u(keys[6], (hidden_size, hidden_size))
        self.w_ho = u(keys[7], (hidden_size, hidden_size))
        self.b_i = u(keys[8], (hidden_size, 1))
        self.b_f = u(keys[9], (hidden_size, 1))
        self.b_g = u(keys[10], (hidden_size, 1))
        self.b_o = u(keys[11], (hidden_size, 1))

        # Fused, pre-transposed parameters (plain-JAX glue, done once).
        # W_x: (D, 4H), W_h: (H, 4H), b: (1, 4H) for gate order (i, f, g, o).
        self.w_x = jnp.concatenate(
            [self.w_ii.T, self.w_if.T, self.w_ig.T, self.w_io.T], axis=1)
        self.w_h = jnp.concatenate(
            [self.w_hi.T, self.w_hf.T, self.w_hg.T, self.w_ho.T], axis=1)
        self.b = jnp.concatenate(
            [self.b_i.T, self.b_f.T, self.b_g.T, self.b_o.T], axis=1)
        # TODO(synk): optionally keep bf16 copies of w_x/w_h for the MXU
        # (preferred_element_type=f32) when scaling H/D; kept f32 here to
        # preserve the module's exact numerics.

    # ---- single step: exact mirror of the PyTorch module's forward ----
    def forward(self, inp, hidden, cell):
        x2d = jnp.reshape(inp, (1, -1)).astype(jnp.float32)       # (T*B=1, D)
        h0 = jnp.reshape(hidden, (1, -1)).astype(jnp.float32)     # (1, H)
        c0 = jnp.reshape(cell, (1, -1)).astype(jnp.float32)       # (1, H)
        _, h_last, c_last = lstm_pallas(x2d, h0, c0, self.w_x, self.w_h, self.b)
        h_out = h_last.reshape(1, 1, -1)       # matches h_t.view(1, 1, -1)
        c_out = c_last.reshape(-1, 1)          # matches column-vector c_t
        return h_out, h_out, c_out

    # ---- multi-step (B=1): T timesteps in ONE pallas_call ----
    def forward_seq(self, x_seq, hidden, cell):
        T = x_seq.shape[0]
        x2d = jnp.reshape(x_seq, (T, -1)).astype(jnp.float32)     # (T*1, D)
        h0 = jnp.reshape(hidden, (1, -1)).astype(jnp.float32)
        c0 = jnp.reshape(cell, (1, -1)).astype(jnp.float32)
        h_seq, h_last, c_last = lstm_pallas(x2d, h0, c0, self.w_x, self.w_h, self.b)
        return (h_seq.reshape(T, -1),          # (T, H) per-step hidden states
                h_last.reshape(1, 1, -1),      # final h, (1, 1, H)
                c_last.reshape(-1, 1))         # final c, (H, 1)

    # ---- batched multi-step: B sequences share one kernel call ----
    def forward_seq_batched(self, x_seq_b, h0_b, c0_b):
        T, B, D = x_seq_b.shape
        x2d = jnp.reshape(x_seq_b, (T * B, D)).astype(jnp.float32)
        h0 = jnp.reshape(h0_b, (B, -1)).astype(jnp.float32)
        c0 = jnp.reshape(c0_b, (B, -1)).astype(jnp.float32)
        h_seq, h_last, c_last = lstm_pallas(x2d, h0, c0, self.w_x, self.w_h, self.b)
        return h_seq.reshape(T, B, -1), h_last, c_last

    # ---- pure-JAX references (direct transcription of the PyTorch forward) ----
    def forward_ref(self, inp, hidden, cell):
        x = jnp.reshape(inp, (-1, 1)).astype(jnp.float32)
        h = jnp.reshape(hidden, (-1, 1)).astype(jnp.float32)
        c = jnp.reshape(cell, (-1, 1)).astype(jnp.float32)
        i_t = jax.nn.sigmoid(self.w_ii @ x + self.w_hi @ h + self.b_i)
        f_t = jax.nn.sigmoid(self.w_if @ x + self.w_hf @ h + self.b_f)
        g_t = jax.nn.sigmoid(self.w_ig @ x + self.w_hg @ h + self.b_g)
        o_t = jax.nn.sigmoid(self.w_io @ x + self.w_ho @ h + self.b_o)
        c_t = f_t * c + i_t * g_t
        h_t = o_t * jnp.tanh(c_t)
        h_t = h_t.reshape(1, 1, -1)
        return h_t, h_t, c_t

    def forward_seq_ref(self, x_seq, hidden, cell):
        h, c = hidden, cell
        hs = []
        for t in range(x_seq.shape[0]):
            h, h, c = self.forward_ref(x_seq[t], h, c)
            hs.append(h.reshape(1, -1))
        return jnp.concatenate(hs, axis=0), h, c


if __name__ == "__main__":
    input_size = 16
    hidden_size = 32
    seq_len = 8
    batch = 4

    key = jax.random.PRNGKey(0)
    k_param, k_x, k_h, k_c, k_xs, k_xb, k_hb, k_cb = jax.random.split(key, 8)

    model = LSTMPallas(input_size, hidden_size, k_param)

    x = jax.random.normal(k_x, (input_size,), jnp.float32)
    hidden0 = jax.random.normal(k_h, (1, 1, hidden_size), jnp.float32)
    cell0 = jax.random.normal(k_c, (hidden_size, 1), jnp.float32)
    x_seq = jax.random.normal(k_xs, (seq_len, input_size), jnp.float32)

    # --- single-step forward (exact module semantics) ---
    out, h_t, c_t = model.forward(x, hidden0, cell0)
    jax.block_until_ready((out, h_t, c_t))
    out_ref, _, c_ref = model.forward_ref(x, hidden0, cell0)
    assert out.shape == (1, 1, hidden_size)
    assert c_t.shape == (hidden_size, 1)
    assert jnp.allclose(out, out_ref, atol=1e-5, rtol=1e-5)
    assert jnp.allclose(c_t, c_ref, atol=1e-5, rtol=1e-5)

    # --- multi-step forward: whole sequence in one pallas_call ---
    h_seq, h_last, c_last = model.forward_seq(x_seq, hidden0, cell0)
    jax.block_until_ready((h_seq, h_last, c_last))
    h_seq_ref, h_last_ref, c_last_ref = model.forward_seq_ref(x_seq, hidden0, cell0)
    assert h_seq.shape == (seq_len, hidden_size)
    assert jnp.allclose(h_seq, h_seq_ref, atol=5e-5, rtol=5e-5)
    assert jnp.allclose(h_last, h_last_ref, atol=5e-5, rtol=5e-5)
    assert jnp.allclose(c_last, c_last_ref, atol=5e-5, rtol=5e-5)

    # --- batched multi-step: B independent sequences in one pallas_call ---
    x_seq_b = jax.random.normal(k_xb, (seq_len, batch, input_size), jnp.float32)
    h0_b = jax.random.normal(k_hb, (batch, hidden_size), jnp.float32)
    c0_b = jax.random.normal(k_cb, (batch, hidden_size), jnp.float32)
    h_seq_b, h_last_b, c_last_b = model.forward_seq_batched(x_seq_b, h0_b, c0_b)
    jax.block_until_ready((h_seq_b, h_last_b, c_last_b))
    for b in range(batch):
        hs_ref, hl_ref, cl_ref = model.forward_seq_ref(
            x_seq_b[:, b, :], h0_b[b], c0_b[b])
        assert jnp.allclose(h_seq_b[:, b, :], hs_ref, atol=5e-5, rtol=5e-5)
        assert jnp.allclose(h_last_b[b], hl_ref.reshape(-1), atol=5e-5, rtol=5e-5)
        assert jnp.allclose(c_last_b[b], cl_ref.reshape(-1), atol=5e-5, rtol=5e-5)

    print("KERNEL_OK")
</pallas_src>

<mosaic_0001>
module attributes {stable_mosaic.version = 11 : i64} {
  func.func @kernel(%arg0: memref<1x16xf32, #tpu.memory_space<vmem>>, %arg1: memref<1x32xf32, #tpu.memory_space<vmem>>, %arg2: memref<1x32xf32, #tpu.memory_space<vmem>>, %arg3: memref<16x128xf32, #tpu.memory_space<vmem>>, %arg4: memref<32x128xf32, #tpu.memory_space<vmem>>, %arg5: memref<1x128xf32, #tpu.memory_space<vmem>>, %arg6: memref<1x32xf32, #tpu.memory_space<vmem>>, %arg7: memref<1x32xf32, #tpu.memory_space<vmem>>, %arg8: memref<1x32xf32, #tpu.memory_space<vmem>>) attributes {dimension_semantics = [], scalar_prefetch = 0 : i64, scratch_operands = 0 : i64, tpu.core_type = #tpu.core_type<tc>} {
    %c0 = arith.constant 0 : index
    %c0_0 = arith.constant 0 : index
    %0 = vector.load %arg0[%c0, %c0_0] : memref<1x16xf32, #tpu.memory_space<vmem>>, vector<1x16xf32>
    %c0_1 = arith.constant 0 : index
    %c0_2 = arith.constant 0 : index
    %1 = vector.load %arg3[%c0_1, %c0_2] : memref<16x128xf32, #tpu.memory_space<vmem>>, vector<16x128xf32>
    %cst = arith.constant dense<0.000000e+00> : vector<1x128xf32>
    %2 = tpu.matmul %0, %1, %cst {dimension_numbers = #tpu.dot_dimension_numbers<[1], [0], [0], [1], [0, 0, 1, 1], [], []>} : vector<1x16xf32>, vector<16x128xf32>, vector<1x128xf32> -> vector<1x128xf32>
    %c0_3 = arith.constant 0 : index
    %c0_4 = arith.constant 0 : index
    %3 = vector.load %arg5[%c0_3, %c0_4] : memref<1x128xf32, #tpu.memory_space<vmem>>, vector<1x128xf32>
    %4 = arith.addf %2, %3 : vector<1x128xf32>
    %c0_5 = arith.constant 0 : index
    %c0_6 = arith.constant 0 : index
    %5 = vector.load %arg4[%c0_5, %c0_6] : memref<32x128xf32, #tpu.memory_space<vmem>>, vector<32x128xf32>
    %c0_7 = arith.constant 0 : index
    %c0_8 = arith.constant 0 : index
    %6 = vector.load %arg1[%c0_7, %c0_8] : memref<1x32xf32, #tpu.memory_space<vmem>>, vector<1x32xf32>
    %c0_9 = arith.constant 0 : index
    %c0_10 = arith.constant 0 : index
    %7 = vector.load %arg2[%c0_9, %c0_10] : memref<1x32xf32, #tpu.memory_space<vmem>>, vector<1x32xf32>
    %cst_11 = arith.constant dense<0.000000e+00> : vector<1x128xf32>
    %8 = tpu.matmul %6, %5, %cst_11 {dimension_numbers = #tpu.dot_dimension_numbers<[1], [0], [0], [1], [0, 0, 1, 1], [], []>} : vector<1x32xf32>, vector<32x128xf32>, vector<1x128xf32> -> vector<1x128xf32>
    %9 = arith.addf %4, %8 : vector<1x128xf32>
    %10 = arith.negf %9 : vector<1x128xf32>
    %11 = math.exp %10 : vector<1x128xf32>
    %cst_12 = arith.constant 1.000000e+00 : f32
    %12 = vector.broadcast %cst_12 : f32 to vector<1x128xf32>
    %13 = arith.addf %12, %11 : vector<1x128xf32>
    %14 = arith.divf %12, %13 : vector<1x128xf32>
    %15 = vector.extract_strided_slice %14 {offsets = [0, 0], sizes = [1, 32], strides = [1, 1]} : vector<1x128xf32> to vector<1x32xf32>
    %16 = vector.extract_strided_slice %14 {offsets = [0, 32], sizes = [1, 32], strides = [1, 1]} : vector<1x128xf32> to vector<1x32xf32>
    %17 = vector.extract_strided_slice %14 {offsets = [0, 64], sizes = [1, 32], strides = [1, 1]} : vector<1x128xf32> to vector<1x32xf32>
    %18 = vector.extract_strided_slice %14 {offsets = [0, 96], sizes = [1, 32], strides = [1, 1]} : vector<1x128xf32> to vector<1x32xf32>
    %19 = arith.mulf %16, %7 : vector<1x32xf32>
    %20 = arith.mulf %15, %17 : vector<1x32xf32>
    %21 = arith.addf %19, %20 : vector<1x32xf32>
    %22 = math.tanh %21 : vector<1x32xf32>
    %23 = arith.mulf %18, %22 : vector<1x32xf32>
    %c0_13 = arith.constant 0 : index
    %c0_14 = arith.constant 0 : index
    %24 = vector.load %arg6[%c0_13, %c0_14] : memref<1x32xf32, #tpu.memory_space<vmem>>, vector<1x32xf32>
    tpu.vector_store %arg6[%c0_13, %c0_14], %23 {strides = array<i32>} : memref<1x32xf32, #tpu.memory_space<vmem>>, vector<1x32xf32>,
    %c0_15 = arith.constant 0 : index
    %c0_16 = arith.constant 0 : index
    %25 = vector.load %arg7[%c0_15, %c0_16] : memref<1x32xf32, #tpu.memory_space<vmem>>, vector<1x32xf32>
    tpu.vector_store %arg7[%c0_15, %c0_16], %23 {strides = array<i32>} : memref<1x32xf32, #tpu.memory_space<vmem>>, vector<1x32xf32>,
    %c0_17 = arith.constant 0 : index
    %c0_18 = arith.constant 0 : index
    %26 = vector.load %arg8[%c0_17, %c0_18] : memref<1x32xf32, #tpu.memory_space<vmem>>, vector<1x32xf32>
    tpu.vector_store %arg8[%c0_17, %c0_18], %21 {strides = array<i32>} : memref<1x32xf32, #tpu.memory_space<vmem>>, vector<1x32xf32>,
    return
  }
}

</mosaic_0001>

<llo_original>
// kernel: _lstm_pallas.1
$region0: #{_lstm_pallas.1}
  #allocation0 [shape = 'u32[]', space=smem, size = 0x4, offset = 0x4, fixed_abs, tag = 'smem constant byte address 0x4 - core index']
  #allocation1 [shape = 'u32[144,128]{1,0:T(1,128)}', space=vmem, size = 0x12000, scoped, tag = 'internal scratch']
  %s0 = inlined_call_operand.hbm [shape: f32[1,16], index: 0, kind: input, shape index: {}]
  %s1 = inlined_call_operand.vmem [shape: f32[1,32], index: 1, kind: input, shape index: {}]
  %s2 = inlined_call_operand.vmem [shape: f32[1,32], index: 2, kind: input, shape index: {}]
  %s3 = inlined_call_operand.hbm [shape: f32[16,128], index: 3, kind: input, shape index: {}]
  %s4 = inlined_call_operand.hbm [shape: f32[32,128], index: 4, kind: input, shape index: {}]
  %s5 = inlined_call_operand.vmem [shape: f32[1,128], index: 5, kind: input, shape index: {}]
  %s6 = inlined_call_operand.hbm [shape: f32[1,32], index: 6, kind: output, shape index: {0}]
  %s7 = inlined_call_operand.hbm [shape: f32[1,32], index: 7, kind: output, shape index: {1}]
  %s8 = inlined_call_operand.hbm [shape: f32[1,32], index: 8, kind: output, shape index: {2}]
  %9 = xla_tuple %s6, %s7, %s8
  %s10 = sld [smem:[#allocation0]]
  $region62: #{_lstm_pallas.1} parent=0
    _
  %s12 = ssub.s32 1, %s10
  %s13 = scalar_select 0, %s12, %s10
  $region1: #{_lstm_pallas.1} parent=0
    #allocation2 [shape = 'u8[512]{0}', space=vmem, size = 0x400, scoped, tag = 'input window, operand 0, single buffered']
    #allocation3 [shape = 's32[1]{0}', space=sflag, size = 0x4, scoped, tag = 'scoped memory for _lstm_pallas.1']
    #allocation4 [shape = 's32[1]{0}', space=sflag, size = 0x4, scoped, tag = 'scoped memory for _lstm_pallas.1']
    #allocation5 [shape = 'u8[8192]{0}', space=vmem, size = 0x2000, scoped, tag = 'input window, operand 3, single buffered']
    #allocation6 [shape = 's32[1]{0}', space=sflag, size = 0x4, scoped, tag = 'scoped memory for _lstm_pallas.1']
    #allocation7 [shape = 'u8[16384]{0}', space=vmem, size = 0x4000, scoped, tag = 'input window, operand 4, single buffered']
    #allocation8 [shape = 'u8[512]{0}', space=vmem, size = 0x400, scoped, tag = 'output window, operand 0, single buffered']
    #allocation9 [shape = 'u8[512]{0}', space=vmem, size = 0x400, scoped, tag = 'output window, operand 1, single buffered']
    #allocation10 [shape = 's32[1]{0}', space=sflag, size = 0x4, scoped, tag = 'scoped memory for _lstm_pallas.1']
    #allocation11 [shape = 'u8[512]{0}', space=vmem, size = 0x400, scoped, tag = 'output window, operand 2, single buffered']
    %14 = vsyncpa [#allocation3], 0
    %15 = vsyncpa [#allocation6], 0
    %16 = vsyncpa [#allocation4], 0
    %17 = vsyncpa [#allocation10], 0
    // Predicated region
    $region2: #{_lstm_pallas.1} parent=1 // pred_check
      _
    $region3: #{_lstm_pallas.1} parent=1 // pred_check_branch
      %19 = sbr.rel (0) target = $region5
    $region4: #{_lstm_pallas.1} parent=1 // pred_region
      %s21 = ssub.s32 16, 16
      %22 = vsyncadd [#allocation3], %s21
      %s24 = sshll.u32 [#allocation2], 4
      %s25 = int_to_ptr.vmem [resolvable:$true] %s24
      %27 = dma.hbm_to_vmem [thread:$0]  %s0, 16, %s25, [#allocation3]
    $region5: #{_lstm_pallas.1} parent=1 // pred_fallthru
      _
    // Predicated region
    $region6: #{_lstm_pallas.1} parent=1 // pred_check
      _
    $region7: #{_lstm_pallas.1} parent=1 // pred_check_branch
      %29 = sbr.rel (0) target = $region9
    $region8: #{_lstm_pallas.1} parent=1 // pred_region
      _
    $region9: #{_lstm_pallas.1} parent=1 // pred_fallthru
      _
    // Predicated region
    $region10: #{_lstm_pallas.1} parent=1 // pred_check
      _
    $region11: #{_lstm_pallas.1} parent=1 // pred_check_branch
      %31 = sbr.rel (0) target = $region13
    $region12: #{_lstm_pallas.1} parent=1 // pred_region
      _
    $region13: #{_lstm_pallas.1} parent=1 // pred_fallthru
      _
    // Predicated region
    $region14: #{_lstm_pallas.1} parent=1 // pred_check
      _
    $region15: #{_lstm_pallas.1} parent=1 // pred_check_branch
      %33 = sbr.rel (0) target = $region17
    $region16: #{_lstm_pallas.1} parent=1 // pred_region
      %s35 = ssub.s32 256, 256
      %36 = vsyncadd [#allocation6], %s35
      %s37 = sshll.u32 [#allocation5], 4
      %s38 = int_to_ptr.vmem [resolvable:$true] %s37
      %43 = dma.hbm_to_vmem [thread:$0]  %s3, 256, %s38, [#allocation6], 128, 128, 8
    $region17: #{_lstm_pallas.1} parent=1 // pred_fallthru
      _
    // Predicated region
    $region18: #{_lstm_pallas.1} parent=1 // pred_check
      _
    $region19: #{_lstm_pallas.1} parent=1 // pred_check_branch
      %45 = sbr.rel (0) target = $region21
    $region20: #{_lstm_pallas.1} parent=1 // pred_region
      %s47 = ssub.s32 512, 512
      %48 = vsyncadd [#allocation6], %s47
      %s49 = sshll.u32 [#allocation7], 4
      %s50 = int_to_ptr.vmem [resolvable:$true] %s49
      %55 = dma.hbm_to_vmem [thread:$0]  %s4, 512, %s50, [#allocation6], 128, 128, 8
    $region21: #{_lstm_pallas.1} parent=1 // pred_fallthru
      _
    // Predicated region
    $region22: #{_lstm_pallas.1} parent=1 // pred_check
      _
    $region23: #{_lstm_pallas.1} parent=1 // pred_check_branch
      %57 = sbr.rel (0) target = $region25
    $region24: #{_lstm_pallas.1} parent=1 // pred_region
      _
    $region25: #{_lstm_pallas.1} parent=1 // pred_fallthru
      _
    // Predicated region
    $region26: #{_lstm_pallas.1} parent=1 // pred_check
      _
    $region27: #{_lstm_pallas.1} parent=1 // pred_check_branch
      %59 = sbr.rel (0) target = $region29
    $region28: #{_lstm_pallas.1} parent=1 // pred_region
      %60 = dma.done [#allocation3], 16
    $region29: #{_lstm_pallas.1} parent=1 // pred_fallthru
      _
    // Predicated region
    $region30: #{_lstm_pallas.1} parent=1 // pred_check
      _
    $region31: #{_lstm_pallas.1} parent=1 // pred_check_branch
      %62 = sbr.rel (0) target = $region33
    $region32: #{_lstm_pallas.1} parent=1 // pred_region
      %63 = dma.done [#allocation6], 256
    $region33: #{_lstm_pallas.1} parent=1 // pred_fallthru
      _
    // Predicated region
    $region34: #{_lstm_pallas.1} parent=1 // pred_check
      _
    $region35: #{_lstm_pallas.1} parent=1 // pred_check_branch
      %65 = sbr.rel (0) target = $region37
    $region36: #{_lstm_pallas.1} parent=1 // pred_region
      %66 = dma.done [#allocation6], 512
    $region37: #{_lstm_pallas.1} parent=1 // pred_fallthru
      _
    %v67 = vld [vmem:[#allocation2] sm:$0x1]
    %v68 = vld [vmem:[#allocation5] sm:$0xff]
    %v69 = vld [vmem:[#allocation5 + $0x8] sm:$0xff]
    %v70 = vld [vmem:[%s5] sm:$0x1]
    %vm71 = vcmask 130048
    %v73 = vsel %vm71, %v67, 0
    %75 = vmatprep.subr.mxu0 0.0
    %76 = vmatpush1.msra.mxu0 %v68
    %77 = vmatprep.subr.mxu0 0.0
    %78 = vmatpush1.msra.mxu0 %v69
    %79 = vmatprep.subr.mxu0 0.0
    %80 = vmatpush1.msra.mxu0 0.0
    %81 = vmatprep.subr.mxu0 0.0
    %82 = vmatpush1.msra.mxu0 0.0
    %83 = vmatprep.subr.mxu0 0.0
    %84 = vmatpush1.msra.mxu0 0.0
    %85 = vmatprep.subr.mxu0 0.0
    %86 = vmatpush1.msra.mxu0 0.0
    %87 = vmatprep.subr.mxu0 0.0
    %88 = vmatpush1.msra.mxu0 0.0
    %89 = vmatprep.subr.mxu0 0.0
    %90 = vmatpush1.msra.mxu0 0.0
    %91 = vmatprep.subr.mxu0 0.0
    %92 = vmatpush1.msra.mxu0 0.0
    %93 = vmatprep.subr.mxu0 0.0
    %94 = vmatpush1.msra.mxu0 0.0
    %95 = vmatprep.subr.mxu0 0.0
    %96 = vmatpush1.msra.mxu0 0.0
    %97 = vmatprep.subr.mxu0 0.0
    %98 = vmatpush1.msra.mxu0 0.0
    %99 = vmatprep.subr.mxu0 0.0
    %100 = vmatpush1.msra.mxu0 0.0
    %101 = vmatprep.subr.mxu0 0.0
    %102 = vmatpush1.msra.mxu0 0.0
    %103 = vmatprep.subr.mxu0 0.0
    %104 = vmatpush1.msra.mxu0 0.0
    %105 = vmatprep.subr.mxu0 0.0
    %106 = vmatpush1.msra.mxu0 0.0
    %107 = vmatprep.subr.mxu0 0.0
    %108 = vmatpush1.msra.mxu0 0.0
    %109 = vmatprep.subr.mxu0 0.0
    %110 = vmatpush1.msra.mxu0 0.0
    %111 = vmatprep.subr.mxu0 0.0
    %112 = vmatpush1.msra.mxu0 0.0
    %113 = vmatprep.subr.mxu0 0.0
    %114 = vmatpush1.msra.mxu0 0.0
    %115 = vmatprep.subr.mxu0 0.0
    %116 = vmatpush1.msra.mxu0 0.0
    %117 = vmatprep.subr.mxu0 0.0
    %118 = vmatpush1.msra.mxu0 0.0
    %119 = vmatprep.subr.mxu0 0.0
    %120 = vmatpush1.msra.mxu0 0.0
    %121 = vmatprep.subr.mxu0 0.0
    %122 = vmatpush1.msra.mxu0 0.0
    %123 = vmatprep.subr.mxu0 0.0
    %124 = vmatpush1.msra.mxu0 0.0
    %125 = vmatprep.subr.mxu0 0.0
    %126 = vmatpush1.msra.mxu0 0.0
    %127 = vmatprep.subr.mxu0 0.0
    %128 = vmatpush1.msra.mxu0 0.0
    %129 = vmatprep.subr.mxu0 0.0
    %130 = vmatpush1.msra.mxu0 0.0
    %131 = vmatprep.subr.mxu0 0.0
    %132 = vmatpush1.msra.mxu0 0.0
    %133 = vmatprep.subr.mxu0 0.0
    %134 = vmatpush1.msra.mxu0 0.0
    %135 = vmatprep.subr.mxu0 0.0
    %136 = vmatpush1.msra.mxu0 0.0
    %137 = vmatprep.subr.mxu0 0.0
    %138 = vmatpush1.msra.mxu0 0.0
    %139 = vmatprep.mubr.f32.mxu0 0.0
    %140 = vmatmul.mubr.f32.gmra.mrb[0].mxu0 %v73
    %v141 = vpop.f32.mrb[0].mxu0
    %v142 = vadd.f32 %v70, %v141
    %v143 = vpop.f32.mrb[0].mxu0
    %144 = vdwg.mxu0
    %v145 = vld [vmem:[#allocation7] sm:$0xff]
    %v146 = vld [vmem:[#allocation7 + $0x8] sm:$0xff]
    %v147 = vld [vmem:[#allocation7 + $0x10] sm:$0xff]
    %v148 = vld [vmem:[#allocation7 + $0x18] sm:$0xff]
    %v149 = vld [vmem:[%s1] sm:$0x1]
    %v150 = vld [vmem:[%s2] sm:$0x1]
    %vm151 = vcmask 261120
    %v153 = vsel %vm151, %v149, 0
    %155 = vmatprep.subr.mxu0 0.0
    %156 = vmatpush1.msra.mxu0 %v145
    %157 = vmatprep.subr.mxu0 0.0
    %158 = vmatpush1.msra.mxu0 %v146
    %159 = vmatprep.subr.mxu0 0.0
    %160 = vmatpush1.msra.mxu0 %v147
    %161 = vmatprep.subr.mxu0 0.0
    %162 = vmatpush1.msra.mxu0 %v148
    %163 = vmatprep.subr.mxu0 0.0
    %164 = vmatpush1.msra.mxu0 0.0
    %165 = vmatprep.subr.mxu0 0.0
    %166 = vmatpush1.msra.mxu0 0.0
    %167 = vmatprep.subr.mxu0 0.0
    %168 = vmatpush1.msra.mxu0 0.0
    %169 = vmatprep.subr.mxu0 0.0
    %170 = vmatpush1.msra.mxu0 0.0
    %171 = vmatprep.subr.mxu0 0.0
    %172 = vmatpush1.msra.mxu0 0.0
    %173 = vmatprep.subr.mxu0 0.0
    %174 = vmatpush1.msra.mxu0 0.0
    %175 = vmatprep.subr.mxu0 0.0
    %176 = vmatpush1.msra.mxu0 0.0
    %177 = vmatprep.subr.mxu0 0.0
    %178 = vmatpush1.msra.mxu0 0.0
    %179 = vmatprep.subr.mxu0 0.0
    %180 = vmatpush1.msra.mxu0 0.0
    %181 = vmatprep.subr.mxu0 0.0
    %182 = vmatpush1.msra.mxu0 0.0
    %183 = vmatprep.subr.mxu0 0.0
    %184 = vmatpush1.msra.mxu0 0.0
    %185 = vmatprep.subr.mxu0 0.0
    %186 = vmatpush1.msra.mxu0 0.0
    %187 = vmatprep.subr.mxu0 0.0
    %188 = vmatpush1.msra.mxu0 0.0
    %189 = vmatprep.subr.mxu0 0.0
    %190 = vmatpush1.msra.mxu0 0.0
    %191 = vmatprep.subr.mxu0 0.0
    %192 = vmatpush1.msra.mxu0 0.0
    %193 = vmatprep.subr.mxu0 0.0
    %194 = vmatpush1.msra.mxu0 0.0
    %195 = vmatprep.subr.mxu0 0.0
    %196 = vmatpush1.msra.mxu0 0.0
    %197 = vmatprep.subr.mxu0 0.0
    %198 = vmatpush1.msra.mxu0 0.0
    %199 = vmatprep.subr.mxu0 0.0
    %200 = vmatpush1.msra.mxu0 0.0
    %201 = vmatprep.subr.mxu0 0.0
    %202 = vmatpush1.msra.mxu0 0.0
    %203 = vmatprep.subr.mxu0 0.0
    %204 = vmatpush1.msra.mxu0 0.0
    %205 = vmatprep.subr.mxu0 0.0
    %206 = vmatpush1.msra.mxu0 0.0
    %207 = vmatprep.subr.mxu0 0.0
    %208 = vmatpush1.msra.mxu0 0.0
    %209 = vmatprep.subr.mxu0 0.0
    %210 = vmatpush1.msra.mxu0 0.0
    %211 = vmatprep.subr.mxu0 0.0
    %212 = vmatpush1.msra.mxu0 0.0
    %213 = vmatprep.subr.mxu0 0.0
    %214 = vmatpush1.msra.mxu0 0.0
    %215 = vmatprep.subr.mxu0 0.0
    %216 = vmatpush1.msra.mxu0 0.0
    %217 = vmatprep.subr.mxu0 0.0
    %218 = vmatpush1.msra.mxu0 0.0
    %219 = vmatprep.mubr.f32.mxu0 0.0
    %220 = vmatmul.mubr.f32.gmra.mrb[0].mxu0 %v153
    %v221 = vpop.f32.mrb[0].mxu0
    %v222 = vadd.f32 0.0, %v221
    %v223 = vpop.f32.mrb[0].mxu0
    %224 = vdwg.mxu0
    %v225 = vadd.f32 %v142, %v222
    %v226 = vxor.u32 %v225, 2147483648
    %v227 = vmul.f32 %v226, 1.442695
    %v228 = vpow.pop %v227
    %v229 = vadd.f32 %v228, 1.0
    %v230 = vrcp.pop %v229
    %v231 = vmul.f32 1.0, %v230
    %v233 = vlaneseq
    %v234 = vshrl.u32 %v233, 7
    %v235 = vsub.s32 0, %v234
    %v236 = vrot.slane %v150, %v235
    %237 = vrot.lane.b32.xlu0 %v236, 32
    %v238 = vpop.permute.xlu0 %237
    %v240 = vmul.f32 %v231, %v238
    %242 = vrot.lane.b32.xlu0 %v231, 64
    %v243 = vpop.permute.xlu0 %242
    %v245 = vmul.f32 %v231, %v243
    %247 = vrot.lane.b32.xlu0 %v245, 32
    %v248 = vpop.permute.xlu0 %247
    %v250 = vadd.f32 %v240, %v248
    %v251 = vtanh.pop %v250
    %253 = vrot.lane.b32.xlu0 %v251, 64
    %v254 = vpop.permute.xlu0 %253
    %v256 = vmul.f32 %v231, %v254
    %258 = vrot.lane.b32.xlu0 %v256, 32
    %v259 = vpop.permute.xlu0 %258
    %vm261 = vcmask 253952
    %262 = vst.msk [vmem:[#allocation8] sm:$0x1] %vm261, %v259
    %263 = vst.msk [vmem:[#allocation9] sm:$0x1] %vm261, %v259
    %265 = vrot.lane.b32.xlu0 %v250, 96
    %v266 = vpop.permute.xlu0 %265
    %268 = vst.msk [vmem:[#allocation11] sm:$0x1] %vm261, %v266
    // Predicated region
    $region38: #{_lstm_pallas.1} parent=1 // pred_check
      _
    $region39: #{_lstm_pallas.1} parent=1 // pred_check_branch
      %270 = sbr.rel (0) target = $region41
    $region40: #{_lstm_pallas.1} parent=1 // pred_region
      %s272 = ssub.s32 16, 16
      %273 = vsyncadd [#allocation4], %s272
      %s275 = sshll.u32 [#allocation8], 4
      %s276 = int_to_ptr.vmem [resolvable:$true] %s275
      %278 = dma.vmem_to_hbm [thread:$0]  %s276, 16, %s6, [#allocation4]
    $region41: #{_lstm_pallas.1} parent=1 // pred_fallthru
      _
    // Predicated region
    $region42: #{_lstm_pallas.1} parent=1 // pred_check
      _
    $region43: #{_lstm_pallas.1} parent=1 // pred_check_branch
      %280 = sbr.rel (0) target = $region45
    $region44: #{_lstm_pallas.1} parent=1 // pred_region
      %s282 = ssub.s32 16, 16
      %283 = vsyncadd [#allocation10], %s282
      %s285 = sshll.u32 [#allocation9], 4
      %s286 = int_to_ptr.vmem [resolvable:$true] %s285
      %288 = dma.vmem_to_hbm [thread:$0]  %s286, 16, %s7, [#allocation10]
    $region45: #{_lstm_pallas.1} parent=1 // pred_fallthru
      _
    // Predicated region
    $region46: #{_lstm_pallas.1} parent=1 // pred_check
      _
    $region47: #{_lstm_pallas.1} parent=1 // pred_check_branch
      %290 = sbr.rel (0) target = $region49
    $region48: #{_lstm_pallas.1} parent=1 // pred_region
      %s292 = ssub.s32 16, 16
      %293 = vsyncadd [#allocation10], %s292
      %s295 = sshll.u32 [#allocation11], 4
      %s296 = int_to_ptr.vmem [resolvable:$true] %s295
      %298 = dma.vmem_to_hbm [thread:$0]  %s296, 16, %s8, [#allocation10]
    $region49: #{_lstm_pallas.1} parent=1 // pred_fallthru
      _
    // Predicated region
    $region50: #{_lstm_pallas.1} parent=1 // pred_check
      _
    $region51: #{_lstm_pallas.1} parent=1 // pred_check_branch
      %300 = sbr.rel (0) target = $region53
    $region52: #{_lstm_pallas.1} parent=1 // pred_region
      %301 = dma.done [#allocation4], 16
    $region53: #{_lstm_pallas.1} parent=1 // pred_fallthru
      _
    // Predicated region
    $region54: #{_lstm_pallas.1} parent=1 // pred_check
      _
    $region55: #{_lstm_pallas.1} parent=1 // pred_check_branch
      %303 = sbr.rel (0) target = $region57
    $region56: #{_lstm_pallas.1} parent=1 // pred_region
      %304 = dma.done [#allocation10], 16
    $region57: #{_lstm_pallas.1} parent=1 // pred_fallthru
      _
    // Predicated region
    $region58: #{_lstm_pallas.1} parent=1 // pred_check
      _
    $region59: #{_lstm_pallas.1} parent=1 // pred_check_branch
      %306 = sbr.rel (0) target = $region61
    $region60: #{_lstm_pallas.1} parent=1 // pred_region
      %307 = dma.done [#allocation10], 16
    $region61: #{_lstm_pallas.1} parent=1 // pred_fallthru
      _
    %308 = vsyncpa [#allocation3], 1
    %309 = vsyncpa [#allocation6], 1
    %310 = vsyncpa [#allocation4], 1
    %311 = vsyncpa [#allocation10], 1

</llo_original>
